<compile_context>
chip_gen: v7x
topology: tpu7x:2x2x1
jax: 0.10.0
libtpu: 0.0.40
codegen_flags: <defaults>
</compile_context>

<pallas_src>
import functools

import jax
import jax.numpy as jnp
from jax import lax
from jax.experimental import pallas as pl
from jax.experimental.pallas import tpu as pltpu


def _round_up(x, m):
    return ((x + m - 1) // m) * m


def _supcon_tile_kernel(row_lab_ref, col_lab_ref, q_ref, k_ref, out_ref,
                        m_scr, d_scr, pz_scr, pc_scr,
                        *, logit_scale, loss_scale, n_valid_cols, has_col_pad):
    """One (row-tile, col-tile) step of the online SupCon reduction.

    row_lab_ref: [TM, 1] int32  anchor labels for this row tile (-1 = padding)
    col_lab_ref: [1, TK] int32  contrast labels for this column tile
    q_ref:       [TM, D] anchors (f32: pre-scaled by 1/temperature)
    k_ref:       [TK, D] contrast features
    out_ref:     [TM, 1] f32    per-anchor loss (written at the last col tile)
    All running state is [TM, 1] f32:
      m_scr  running row max of scaled logits
      d_scr  running softmax denominator  sum_kept exp(s - m)
      pz_scr running sum over kept positives of the scaled logits
      pc_scr running count of kept positives
    """
    i = pl.program_id(0)
    j = pl.program_id(1)
    n_col_tiles = pl.num_programs(1)
    tm = q_ref.shape[0]
    tk = k_ref.shape[0]

    @pl.when(j == 0)
    def _init():
        m_scr[...] = jnp.full(m_scr.shape, -jnp.inf, dtype=m_scr.dtype)
        d_scr[...] = jnp.zeros_like(d_scr)
        pz_scr[...] = jnp.zeros_like(pz_scr)
        pc_scr[...] = jnp.zeros_like(pc_scr)

    # Scaled-logits tile: contraction on the last dim of both operands (no
    # transpose), f32 accumulation on the MXU.
    s = lax.dot_general(q_ref[...], k_ref[...],
                        dimension_numbers=(((1,), (1,)), ((), ())),
                        preferred_element_type=jnp.float32)          # [tm, tk]
    if logit_scale != 1.0:           # bf16 operand path: scale f32 logits here
        s = s * logit_scale

    # Self-contrast exclusion (+ padded-column exclusion), applied
    # unconditionally: far cheaper than carrying full tiles through lax.cond.
    r_idx = i * tm + lax.broadcasted_iota(jnp.int32, (tm, tk), 0)
    c_idx = j * tk + lax.broadcasted_iota(jnp.int32, (tm, tk), 1)
    keep = r_idx != c_idx
    if has_col_pad:
        keep = jnp.logical_and(keep, c_idx < n_valid_cols)

    # Online (flash-style) max.  m is the max over ALL columns seen (incl. the
    # self-similarity and padded zeros) so it upper-bounds the kept columns ->
    # exp never overflows; the final loss is stabilizer-invariant.
    m_prev = m_scr[...]
    m_new = jnp.maximum(m_prev, jnp.max(s, axis=1, keepdims=True))   # [tm, 1]
    alpha = jnp.exp(m_prev - m_new)                                  # [tm, 1]
    e = jnp.where(keep, jnp.exp(s - m_new), 0.0)                     # [tm, tk]

    # Positive-pair mask tile straight from the labels, fused with keep.
    posf = jnp.where(
        jnp.logical_and(row_lab_ref[...] == col_lab_ref[...], keep),
        1.0, 0.0)                                                    # [tm, tk]

    # One row reduction per quantity per tile; only [TM, 1] state survives.
    m_scr[...] = m_new
    d_scr[...] = d_scr[...] * alpha + jnp.sum(e, axis=1, keepdims=True)
    pz_scr[...] = pz_scr[...] + jnp.sum(posf * s, axis=1, keepdims=True)
    pc_scr[...] = pc_scr[...] + jnp.sum(posf, axis=1, keepdims=True)

    @pl.when(j == n_col_tiles - 1)
    def _finalize():
        # sum(mask*log_prob)/sum(mask) = sum(mask*s)/count - (max + log(denom))
        # (padded rows have count == 0 -> NaN, sliced away in the wrapper,
        #  matching PyTorch's behavior for anchors with no positives).
        mean_log_prob_pos = (pz_scr[...] / pc_scr[...]
                             - m_scr[...] - jnp.log(d_scr[...]))
        out_ref[...] = (loss_scale * mean_log_prob_pos).astype(out_ref.dtype)


def supcon_loss(features, labels=None, mask=None, temperature=0.07,
                base_temperature=0.07, contrast_mode="all",
                block_m=256, block_k=512, compute_dtype=jnp.bfloat16):
    """JAX/Pallas equivalent of SupConLoss.forward.

    features:      [bsz, n_views, ...] (trailing dims flattened)
    labels:        [bsz] int, optional
    mask:          unsupported in the tiled kernel (see TODO below)
    block_m/k:     row / column tile sizes (block_m multiple of 8, block_k
                   multiple of 128; 256-multiples preferred on v6e/v7x)
    compute_dtype: dtype of the matmul operands (default bf16 -> half the HBM
                   traffic, native MXU rate).  Accumulation is always f32.
    """
    if features.ndim < 3:
        raise ValueError("`features` needs to be [bsz, n_views, ...]")
    if features.ndim > 3:
        features = features.reshape(features.shape[0], features.shape[1], -1)
    if block_m % 8 != 0 or block_k % 128 != 0:
        raise ValueError("`block_m` must be a multiple of 8 and `block_k` a "
                         "multiple of 128")

    bsz, n_views, dim = features.shape

    if labels is not None and mask is not None:
        raise ValueError("Cannot define both `labels` and `mask`")
    if mask is not None:
        # TODO(synk): arbitrary (possibly asymmetric) [bsz, bsz] masks are not
        # expressible as label equality; only the labels / SimCLR paths run
        # through the tiled Pallas kernel.
        raise NotImplementedError("explicit `mask` is not supported by the kernel")
    if labels is None:
        ids = jnp.arange(bsz, dtype=jnp.int32)          # SimCLR: eye(bsz) mask
    else:
        labels = jnp.asarray(labels).reshape(-1)
        if labels.shape[0] != bsz:
            raise ValueError("Num of labels does not match num of features")
        ids = labels.astype(jnp.int32)

    # torch.cat(torch.unbind(features, dim=1), dim=0) -> view-major stacking.
    contrast = jnp.transpose(features, (1, 0, 2)).reshape(n_views * bsz, dim)
    contrast_ids = jnp.tile(ids, n_views)               # [N]
    n_contrast = contrast.shape[0]

    if contrast_mode == "one":
        anchor, anchor_ids = features[:, 0, :], ids
    elif contrast_mode == "all":
        anchor, anchor_ids = contrast, contrast_ids
    else:
        raise ValueError(f"Unknown mode: {contrast_mode}")
    n_anchor = anchor.shape[0]

    compute_dtype = jnp.dtype(compute_dtype)
    itemsize = compute_dtype.itemsize

    # Tile selection: shrink to the problem, keep alignment, and give the
    # parallel row axis >=2 tiles when the problem is big enough (v7x 2 TCs).
    tm = min(block_m, _round_up(n_anchor, 8))
    if n_anchor > 256 and _round_up(n_anchor, tm) == tm:
        tm = max(256, _round_up((n_anchor + 1) // 2, 128))
    tk = min(block_k, _round_up(n_contrast, 128))

    d_pad = _round_up(dim, 128)                          # fill MXU contraction
    m_pad = _round_up(n_anchor, tm)
    n_pad = _round_up(n_contrast, tk)

    # f32 operands: fold 1/temperature into q (exact, saves a per-tile VPU
    # multiply).  Narrow operands (bf16): keep the operand mantissa and scale
    # the f32 logits inside the kernel instead.
    inv_temp = 1.0 / float(temperature)
    if compute_dtype == jnp.dtype(jnp.float32):
        q = anchor.astype(jnp.float32) * inv_temp
        logit_scale = 1.0
    else:
        q = anchor.astype(compute_dtype)
        logit_scale = inv_temp
    q = q.astype(compute_dtype)
    k = contrast.astype(compute_dtype)

    q = jnp.pad(q, ((0, m_pad - n_anchor), (0, d_pad - dim)))
    k = jnp.pad(k, ((0, n_pad - n_contrast), (0, d_pad - dim)))
    row_lab = jnp.pad(anchor_ids, (0, m_pad - n_anchor),
                      constant_values=-1).reshape(m_pad, 1)
    col_lab = jnp.pad(contrast_ids, (0, n_pad - n_contrast),
                      constant_values=-1).reshape(1, n_pad)

    kernel = functools.partial(
        _supcon_tile_kernel,
        logit_scale=float(logit_scale),
        loss_scale=float(-(temperature / base_temperature)),
        n_valid_cols=int(n_contrast),
        has_col_pad=bool(n_pad > n_contrast))

    # VMEM budget: with [TM, 1] accumulators the only real consumers are the
    # double-buffered q / k tiles.  Cap at half the physical VMEM of whatever
    # generation we are on (v7x only has 64 MiB per TensorCore).
    est_bytes = (2 * (tm + tk) * d_pad * itemsize        # double-buffered q/k
                 + 2 * 4 * (tm + tk)                     # label tiles
                 + 2 * 4 * tm                            # output tile
                 + 4 * 4 * tm)                           # [TM,1] accumulators
    try:
        vmem_cap = int(pltpu.get_tpu_info().vmem_capacity_bytes)
    except Exception:                                    # noqa: BLE001
        vmem_cap = 64 * 1024 * 1024
    vmem_limit = int(min(vmem_cap // 2,
                         max(16 * 1024 * 1024, 4 * est_bytes)))

    grid = (m_pad // tm, n_pad // tk)
    cost = pl.CostEstimate(
        flops=int(2 * m_pad * n_pad * d_pad),
        transcendentals=int(2 * m_pad * n_pad),
        bytes_accessed=int(itemsize * (m_pad * d_pad + grid[0] * n_pad * d_pad)
                           + 4 * (2 * m_pad + n_pad)))

    out = pl.pallas_call(
        kernel,
        out_shape=jax.ShapeDtypeStruct((m_pad, 1), jnp.float32),
        grid_spec=pltpu.PrefetchScalarGridSpec(
            num_scalar_prefetch=0,
            grid=grid,
            in_specs=[
                pl.BlockSpec((tm, 1), lambda i, j: (i, 0)),       # row labels
                pl.BlockSpec((1, tk), lambda i, j: (0, j)),       # col labels
                pl.BlockSpec((tm, d_pad), lambda i, j: (i, 0)),   # anchors
                pl.BlockSpec((tk, d_pad), lambda i, j: (j, 0)),   # contrast
            ],
            out_specs=pl.BlockSpec((tm, 1), lambda i, j: (i, 0)),
            scratch_shapes=[
                pltpu.VMEM((tm, 1), jnp.float32),   # running row max
                pltpu.VMEM((tm, 1), jnp.float32),   # softmax denominator
                pltpu.VMEM((tm, 1), jnp.float32),   # sum(mask * logits)
                pltpu.VMEM((tm, 1), jnp.float32),   # sum(mask)
            ]),
        compiler_params=pltpu.CompilerParams(
            dimension_semantics=("parallel", "arbitrary"),
            vmem_limit_bytes=vmem_limit),
        cost_estimate=cost,
    )(row_lab, col_lab, q, k)

    # loss.view(anchor_count, batch_size).mean() == mean over all real anchors.
    return jnp.mean(out[:n_anchor, 0])


def _reference_supcon(features, labels=None, temperature=0.07,
                      base_temperature=0.07, contrast_mode="all"):
    """Pure-JAX reference mirroring the PyTorch forward."""
    bsz, n_views = features.shape[0], features.shape[1]
    feats = features.reshape(bsz, n_views, -1)
    if labels is None:
        base = jnp.eye(bsz, dtype=jnp.float32)
    else:
        lab = labels.reshape(-1, 1)
        base = (lab == lab.T).astype(jnp.float32)
    cf = jnp.concatenate([feats[:, v, :] for v in range(n_views)], axis=0)
    if contrast_mode == "one":
        af, anchor_count = feats[:, 0, :], 1
    else:
        af, anchor_count = cf, n_views
    n_anchor = af.shape[0]
    adc = (af @ cf.T) / temperature
    logits = adc - jnp.max(adc, axis=1, keepdims=True)
    m = jnp.tile(base, (anchor_count, n_views))
    logits_mask = jnp.ones_like(m).at[jnp.arange(n_anchor),
                                      jnp.arange(n_anchor)].set(0.0)
    m = m * logits_mask
    exp_logits = jnp.exp(logits) * logits_mask
    log_prob = logits - jnp.log(jnp.sum(exp_logits, axis=1, keepdims=True))
    mlpp = jnp.sum(m * log_prob, axis=1) / jnp.sum(m, axis=1)
    return jnp.mean(-(temperature / base_temperature) * mlpp)


if __name__ == "__main__":
    key = jax.random.PRNGKey(0)
    k1, k2, k3, k4 = jax.random.split(key, 4)

    # Case 1: small, single-row-tile path, supervised labels (f32 operands for
    # a tight numerical comparison against the reference).
    bsz, n_views, dim = 8, 2, 32
    f1 = jax.random.normal(k1, (bsz, n_views, dim), dtype=jnp.float32)
    f1 = f1 / jnp.linalg.norm(f1, axis=-1, keepdims=True)
    lab1 = jax.random.randint(k2, (bsz,), 0, 3)

    out1 = jax.block_until_ready(
        supcon_loss(f1, labels=lab1, compute_dtype=jnp.float32))
    ref1 = jax.block_until_ready(_reference_supcon(f1, labels=lab1))
    assert jnp.allclose(out1, ref1, rtol=1e-4, atol=1e-4), (out1, ref1)

    # Case 1b: SimCLR path (no labels, eye mask).
    out1b = jax.block_until_ready(supcon_loss(f1, compute_dtype=jnp.float32))
    ref1b = jax.block_until_ready(_reference_supcon(f1, labels=None))
    assert jnp.allclose(out1b, ref1b, rtol=1e-4, atol=1e-4), (out1b, ref1b)

    # Case 1c: contrast_mode='one'.
    out1c = jax.block_until_ready(
        supcon_loss(f1, labels=lab1, contrast_mode="one",
                    compute_dtype=jnp.float32))
    ref1c = jax.block_until_ready(
        _reference_supcon(f1, labels=lab1, contrast_mode="one"))
    assert jnp.allclose(out1c, ref1c, rtol=1e-4, atol=1e-4), (out1c, ref1c)

    # Case 2: multi-tile grid (2x2) with diagonal tiles, off-diagonal tiles
    # and a padded last column tile (N = 192 -> padded to 256).
    bsz2, n_views2, dim2 = 96, 2, 48
    f2 = jax.random.normal(k3, (bsz2, n_views2, dim2), dtype=jnp.float32)
    f2 = f2 / jnp.linalg.norm(f2, axis=-1, keepdims=True)
    lab2 = jax.random.randint(k4, (bsz2,), 0, 10)

    out2 = jax.block_until_ready(
        supcon_loss(f2, labels=lab2, block_m=128, block_k=128,
                    compute_dtype=jnp.float32))
    ref2 = jax.block_until_ready(_reference_supcon(f2, labels=lab2))
    assert jnp.allclose(out2, ref2, rtol=1e-4, atol=1e-4), (out2, ref2)

    # Case 3: default bf16 operand path (half HBM traffic, native MXU dtype),
    # f32 accumulation and f32 softmax math inside the kernel.
    out3 = jax.block_until_ready(supcon_loss(f2, labels=lab2))
    assert jnp.isfinite(out3), out3
    assert abs(float(out3) - float(ref2)) / max(abs(float(ref2)), 1e-6) < 0.1, (
        out3, ref2)

    print("KERNEL_OK")
</pallas_src>

<mosaic_0001>
module attributes {stable_mosaic.version = 11 : i64} {
  func.func @_supcon_tile_kernel(%arg0: i32, %arg1: i32, %arg2: memref<16x1xi32, #tpu.memory_space<vmem>>, %arg3: memref<1x128xi32, #tpu.memory_space<vmem>>, %arg4: memref<16x128xf32, #tpu.memory_space<vmem>>, %arg5: memref<128x128xf32, #tpu.memory_space<vmem>>, %arg6: memref<16x1xf32, #tpu.memory_space<vmem>>, %arg7: memref<16x1xf32, #tpu.memory_space<vmem>>, %arg8: memref<16x1xf32, #tpu.memory_space<vmem>>, %arg9: memref<16x1xf32, #tpu.memory_space<vmem>>, %arg10: memref<16x1xf32, #tpu.memory_space<vmem>>) attributes {dimension_semantics = [#tpu.dimension_semantics<parallel>, #tpu.dimension_semantics<arbitrary>], iteration_bounds = array<i64: 1, 1>, scalar_prefetch = 0 : i64, scratch_operands = 4 : i64, tpu.core_type = #tpu.core_type<tc>, window_params = [{transform_indices = @transform_0, window_bounds = array<i64: 16, 1>}, {transform_indices = @transform_1, window_bounds = array<i64: 1, 128>}, {transform_indices = @transform_2, window_bounds = array<i64: 16, 128>}, {transform_indices = @transform_3, window_bounds = array<i64: 128, 128>}, {transform_indices = @transform_4, window_bounds = array<i64: 16, 1>}]} {
    %c0_i32 = arith.constant 0 : i32
    %0 = arith.cmpi eq, %arg1, %c0_i32 : i32
    %1 = arith.extui %0 : i1 to i32
    %c0_i32_0 = arith.constant 0 : i32
    %2 = arith.cmpi ne, %1, %c0_i32_0 : i32
    scf.if %2 {
      %cst_34 = arith.constant 0xFF800000 : f32
      %59 = vector.broadcast %cst_34 : f32 to vector<16x1xf32>
      %c0_35 = arith.constant 0 : index
      %c0_36 = arith.constant 0 : index
      %60 = vector.load %arg7[%c0_35, %c0_36] : memref<16x1xf32, #tpu.memory_space<vmem>>, vector<16x1xf32>
      tpu.vector_store %arg7[%c0_35, %c0_36], %59 {strides = array<i32>} : memref<16x1xf32, #tpu.memory_space<vmem>>, vector<16x1xf32>,
      %cst_37 = arith.constant 0.000000e+00 : f32
      %61 = vector.broadcast %cst_37 : f32 to vector<16x1xf32>
      %c0_38 = arith.constant 0 : index
      %c0_39 = arith.constant 0 : index
      %62 = vector.load %arg8[%c0_38, %c0_39] : memref<16x1xf32, #tpu.memory_space<vmem>>, vector<16x1xf32>
      tpu.vector_store %arg8[%c0_38, %c0_39], %61 {strides = array<i32>} : memref<16x1xf32, #tpu.memory_space<vmem>>, vector<16x1xf32>,
      %cst_40 = arith.constant 0.000000e+00 : f32
      %63 = vector.broadcast %cst_40 : f32 to vector<16x1xf32>
      %c0_41 = arith.constant 0 : index
      %c0_42 = arith.constant 0 : index
      %64 = vector.load %arg9[%c0_41, %c0_42] : memref<16x1xf32, #tpu.memory_space<vmem>>, vector<16x1xf32>
      tpu.vector_store %arg9[%c0_41, %c0_42], %63 {strides = array<i32>} : memref<16x1xf32, #tpu.memory_space<vmem>>, vector<16x1xf32>,
      %cst_43 = arith.constant 0.000000e+00 : f32
      %65 = vector.broadcast %cst_43 : f32 to vector<16x1xf32>
      %c0_44 = arith.constant 0 : index
      %c0_45 = arith.constant 0 : index
      %66 = vector.load %arg10[%c0_44, %c0_45] : memref<16x1xf32, #tpu.memory_space<vmem>>, vector<16x1xf32>
      tpu.vector_store %arg10[%c0_44, %c0_45], %65 {strides = array<i32>} : memref<16x1xf32, #tpu.memory_space<vmem>>, vector<16x1xf32>,
    } else {
    }
    %c0 = arith.constant 0 : index
    %c0_1 = arith.constant 0 : index
    %3 = vector.load %arg4[%c0, %c0_1] : memref<16x128xf32, #tpu.memory_space<vmem>>, vector<16x128xf32>
    %c0_2 = arith.constant 0 : index
    %c0_3 = arith.constant 0 : index
    %4 = vector.load %arg5[%c0_2, %c0_3] : memref<128x128xf32, #tpu.memory_space<vmem>>, vector<128x128xf32>
    %cst = arith.constant dense<0.000000e+00> : vector<16x128xf32>
    %5 = tpu.matmul %3, %4, %cst {dimension_numbers = #tpu.dot_dimension_numbers<[1], [1], [0], [0], [0, 0, 1, 0], [], []>} : vector<16x128xf32>, vector<128x128xf32>, vector<16x128xf32> -> vector<16x128xf32>
    %c16_i32 = arith.constant 16 : i32
    %6 = arith.muli %arg0, %c16_i32 : i32
    %7 = tpu.iota {dimensions = array<i32: 0>} : vector<16x128xi32>
    %8 = vector.broadcast %6 : i32 to vector<16x128xi32>
    %9 = arith.addi %8, %7 : vector<16x128xi32>
    %c128_i32 = arith.constant 128 : i32
    %10 = arith.muli %arg1, %c128_i32 : i32
    %11 = tpu.iota {dimensions = array<i32: 1>} : vector<16x128xi32>
    %12 = vector.broadcast %10 : i32 to vector<16x128xi32>
    %13 = arith.addi %12, %11 : vector<16x128xi32>
    %14 = arith.cmpi ne, %9, %13 : vector<16x128xi32>
    %c16_i32_4 = arith.constant 16 : i32
    %15 = vector.broadcast %c16_i32_4 : i32 to vector<16x128xi32>
    %16 = arith.cmpi slt, %13, %15 : vector<16x128xi32>
    %17 = arith.andi %14, %16 : vector<16x128xi1>
    %c0_5 = arith.constant 0 : index
    %c0_6 = arith.constant 0 : index
    %18 = vector.load %arg7[%c0_5, %c0_6] : memref<16x1xf32, #tpu.memory_space<vmem>>, vector<16x1xf32>
    %cst_7 = arith.constant dense<0xFF800000> : vector<16xf32>
    %19 = vector.multi_reduction <maximumf>, %5, %cst_7 [1] : vector<16x128xf32> to vector<16xf32>
    %20 = vector.shape_cast %19 : vector<16xf32> to vector<16x1xf32>
    %21 = arith.maximumf %18, %20 : vector<16x1xf32>
    %22 = arith.subf %18, %21 : vector<16x1xf32>
    %23 = math.exp %22 : vector<16x1xf32>
    %24 = vector.broadcast %21 : vector<16x1xf32> to vector<16x128xf32>
    %25 = arith.subf %5, %24 : vector<16x128xf32>
    %26 = math.exp %25 : vector<16x128xf32>
    %cst_8 = arith.constant 0.000000e+00 : f32
    %27 = vector.broadcast %cst_8 : f32 to vector<16x128xf32>
    %28 = arith.select %17, %26, %27 : vector<16x128xi1>, vector<16x128xf32>
    %c0_9 = arith.constant 0 : index
    %c0_10 = arith.constant 0 : index
    %29 = vector.load %arg2[%c0_9, %c0_10] : memref<16x1xi32, #tpu.memory_space<vmem>>, vector<16x1xi32>
    %c0_11 = arith.constant 0 : index
    %c0_12 = arith.constant 0 : index
    %30 = vector.load %arg3[%c0_11, %c0_12] : memref<1x128xi32, #tpu.memory_space<vmem>>, vector<1x128xi32>
    %31 = vector.broadcast %29 : vector<16x1xi32> to vector<16x128xi32>
    %32 = vector.broadcast %30 : vector<1x128xi32> to vector<16x128xi32>
    %33 = arith.cmpi eq, %31, %32 : vector<16x128xi32>
    %34 = arith.andi %33, %17 : vector<16x128xi1>
    %cst_13 = arith.constant 1.000000e+00 : f32
    %cst_14 = arith.constant 0.000000e+00 : f32
    %35 = vector.broadcast %cst_13 : f32 to vector<16x128xf32>
    %36 = vector.broadcast %cst_14 : f32 to vector<16x128xf32>
    %37 = arith.select %34, %35, %36 : vector<16x128xi1>, vector<16x128xf32>
    %c0_15 = arith.constant 0 : index
    %c0_16 = arith.constant 0 : index
    %38 = vector.load %arg7[%c0_15, %c0_16] : memref<16x1xf32, #tpu.memory_space<vmem>>, vector<16x1xf32>
    tpu.vector_store %arg7[%c0_15, %c0_16], %21 {strides = array<i32>} : memref<16x1xf32, #tpu.memory_space<vmem>>, vector<16x1xf32>,
    %c0_17 = arith.constant 0 : index
    %c0_18 = arith.constant 0 : index
    %39 = vector.load %arg8[%c0_17, %c0_18] : memref<16x1xf32, #tpu.memory_space<vmem>>, vector<16x1xf32>
    %40 = arith.mulf %39, %23 : vector<16x1xf32>
    %cst_19 = arith.constant dense<0.000000e+00> : vector<16xf32>
    %41 = vector.multi_reduction <add>, %28, %cst_19 [1] : vector<16x128xf32> to vector<16xf32>
    %42 = vector.shape_cast %41 : vector<16xf32> to vector<16x1xf32>
    %43 = arith.addf %40, %42 : vector<16x1xf32>
    %c0_20 = arith.constant 0 : index
    %c0_21 = arith.constant 0 : index
    %44 = vector.load %arg8[%c0_20, %c0_21] : memref<16x1xf32, #tpu.memory_space<vmem>>, vector<16x1xf32>
    tpu.vector_store %arg8[%c0_20, %c0_21], %43 {strides = array<i32>} : memref<16x1xf32, #tpu.memory_space<vmem>>, vector<16x1xf32>,
    %c0_22 = arith.constant 0 : index
    %c0_23 = arith.constant 0 : index
    %45 = vector.load %arg9[%c0_22, %c0_23] : memref<16x1xf32, #tpu.memory_space<vmem>>, vector<16x1xf32>
    %46 = arith.mulf %37, %5 : vector<16x128xf32>
    %cst_24 = arith.constant dense<0.000000e+00> : vector<16xf32>
    %47 = vector.multi_reduction <add>, %46, %cst_24 [1] : vector<16x128xf32> to vector<16xf32>
    %48 = vector.shape_cast %47 : vector<16xf32> to vector<16x1xf32>
    %49 = arith.addf %45, %48 : vector<16x1xf32>
    %c0_25 = arith.constant 0 : index
    %c0_26 = arith.constant 0 : index
    %50 = vector.load %arg9[%c0_25, %c0_26] : memref<16x1xf32, #tpu.memory_space<vmem>>, vector<16x1xf32>
    tpu.vector_store %arg9[%c0_25, %c0_26], %49 {strides = array<i32>} : memref<16x1xf32, #tpu.memory_space<vmem>>, vector<16x1xf32>,
    %c0_27 = arith.constant 0 : index
    %c0_28 = arith.constant 0 : index
    %51 = vector.load %arg10[%c0_27, %c0_28] : memref<16x1xf32, #tpu.memory_space<vmem>>, vector<16x1xf32>
    %cst_29 = arith.constant dense<0.000000e+00> : vector<16xf32>
    %52 = vector.multi_reduction <add>, %37, %cst_29 [1] : vector<16x128xf32> to vector<16xf32>
    %53 = vector.shape_cast %52 : vector<16xf32> to vector<16x1xf32>
    %54 = arith.addf %51, %53 : vector<16x1xf32>
    %c0_30 = arith.constant 0 : index
    %c0_31 = arith.constant 0 : index
    %55 = vector.load %arg10[%c0_30, %c0_31] : memref<16x1xf32, #tpu.memory_space<vmem>>, vector<16x1xf32>
    tpu.vector_store %arg10[%c0_30, %c0_31], %54 {strides = array<i32>} : memref<16x1xf32, #tpu.memory_space<vmem>>, vector<16x1xf32>,
    %c0_i32_32 = arith.constant 0 : i32
    %56 = arith.cmpi eq, %arg1, %c0_i32_32 : i32
    %57 = arith.extui %56 : i1 to i32
    %c0_i32_33 = arith.constant 0 : i32
    %58 = arith.cmpi ne, %57, %c0_i32_33 : i32
    scf.if %58 {
      %c0_34 = arith.constant 0 : index
      %c0_35 = arith.constant 0 : index
      %59 = vector.load %arg9[%c0_34, %c0_35] : memref<16x1xf32, #tpu.memory_space<vmem>>, vector<16x1xf32>
      %c0_36 = arith.constant 0 : index
      %c0_37 = arith.constant 0 : index
      %60 = vector.load %arg10[%c0_36, %c0_37] : memref<16x1xf32, #tpu.memory_space<vmem>>, vector<16x1xf32>
      %61 = arith.divf %59, %60 : vector<16x1xf32>
      %c0_38 = arith.constant 0 : index
      %c0_39 = arith.constant 0 : index
      %62 = vector.load %arg7[%c0_38, %c0_39] : memref<16x1xf32, #tpu.memory_space<vmem>>, vector<16x1xf32>
      %63 = arith.subf %61, %62 : vector<16x1xf32>
      %c0_40 = arith.constant 0 : index
      %c0_41 = arith.constant 0 : index
      %64 = vector.load %arg8[%c0_40, %c0_41] : memref<16x1xf32, #tpu.memory_space<vmem>>, vector<16x1xf32>
      %65 = math.log %64 : vector<16x1xf32>
      %66 = arith.subf %63, %65 : vector<16x1xf32>
      %cst_42 = arith.constant -1.000000e+00 : f32
      %67 = vector.broadcast %cst_42 : f32 to vector<16x1xf32>
      %68 = arith.mulf %67, %66 : vector<16x1xf32>
      %c0_43 = arith.constant 0 : index
      %c0_44 = arith.constant 0 : index
      %69 = vector.load %arg6[%c0_43, %c0_44] : memref<16x1xf32, #tpu.memory_space<vmem>>, vector<16x1xf32>
      tpu.vector_store %arg6[%c0_43, %c0_44], %68 {strides = array<i32>} : memref<16x1xf32, #tpu.memory_space<vmem>>, vector<16x1xf32>,
    } else {
    }
    return
  }
  func.func @transform_0(%arg0: i32, %arg1: i32) -> (i32, i32) {
    %c0_i32 = arith.constant 0 : i32
    %c0_i32_0 = arith.constant 0 : i32
    return %arg0, %c0_i32 : i32, i32
  }
  func.func @transform_1(%arg0: i32, %arg1: i32) -> (i32, i32) {
    %c0_i32 = arith.constant 0 : i32
    %c0_i32_0 = arith.constant 0 : i32
    return %c0_i32, %arg1 : i32, i32
  }
  func.func @transform_2(%arg0: i32, %arg1: i32) -> (i32, i32) {
    %c0_i32 = arith.constant 0 : i32
    %c0_i32_0 = arith.constant 0 : i32
    return %arg0, %c0_i32 : i32, i32
  }
  func.func @transform_3(%arg0: i32, %arg1: i32) -> (i32, i32) {
    %c0_i32 = arith.constant 0 : i32
    %c0_i32_0 = arith.constant 0 : i32
    return %arg1, %c0_i32 : i32, i32
  }
  func.func @transform_4(%arg0: i32, %arg1: i32) -> (i32, i32) {
    %c0_i32 = arith.constant 0 : i32
    %c0_i32_0 = arith.constant 0 : i32
    return %arg0, %c0_i32 : i32, i32
  }
}

</mosaic_0001>

<llo_original>
// kernel: tpu_custom_call.1
$region0: #{tpu_custom_call.1}
  #allocation0 [shape = 'u32[]', space=smem, size = 0x4, offset = 0x4, fixed_abs, tag = 'smem constant byte address 0x4 - core index']
  #allocation1 [shape = 'u32[144,128]{1,0:T(1,128)}', space=vmem, size = 0x12000, scoped, tag = 'internal scratch']
  #allocation2 [shape = 'f32[16,1]{1,0:T(8,128)}', space=vmem, size = 0x2000, scoped, tag = 'scratch operand']
  #allocation3 [shape = 'f32[16,1]{1,0:T(8,128)}', space=vmem, size = 0x2000, scoped, tag = 'scratch operand']
  #allocation4 [shape = 'f32[16,1]{1,0:T(8,128)}', space=vmem, size = 0x2000, scoped, tag = 'scratch operand']
  #allocation5 [shape = 'f32[16,1]{1,0:T(8,128)}', space=vmem, size = 0x2000, scoped, tag = 'scratch operand']
  %s0 = inlined_call_operand.vmem [shape: s32[16,1], index: 0, kind: input, shape index: {}]
  %s1 = inlined_call_operand.vmem [shape: s32[1,128], index: 1, kind: input, shape index: {}]
  %s2 = inlined_call_operand.vmem [shape: f32[16,128], index: 2, kind: input, shape index: {}]
  %s3 = inlined_call_operand.hbm [shape: f32[128,128], index: 3, kind: input, shape index: {}]
  %s4 = inlined_call_operand.vmem [shape: f32[16,1], index: 4, kind: output, shape index: {}]
  %s5 = sld [smem:[#allocation0]]
  $region38: #{tpu_custom_call.1} parent=0
    _
  %s7 = ssub.s32 1, %s5
  %s8 = scalar_select 0, %s7, %s5
  $region1: #{tpu_custom_call.1} parent=0
    #allocation6 [shape = 'u8[65536]{0}', space=vmem, size = 0x10000, scoped, tag = 'input window, operand 3, single buffered']
    #allocation7 [shape = 's32[1]{0}', space=sflag, size = 0x4, scoped, tag = 'scoped memory for tpu_custom_call.1']
    %9 = vsyncpa [#allocation7], 0
    // Predicated region
    $region2: #{tpu_custom_call.1} parent=1 // pred_check
      _
    $region3: #{tpu_custom_call.1} parent=1 // pred_check_branch
      %11 = sbr.rel (0) target = $region5
    $region4: #{tpu_custom_call.1} parent=1 // pred_region
      _
    $region5: #{tpu_custom_call.1} parent=1 // pred_fallthru
      _
    // Predicated region
    $region6: #{tpu_custom_call.1} parent=1 // pred_check
      _
    $region7: #{tpu_custom_call.1} parent=1 // pred_check_branch
      %13 = sbr.rel (0) target = $region9
    $region8: #{tpu_custom_call.1} parent=1 // pred_region
      _
    $region9: #{tpu_custom_call.1} parent=1 // pred_fallthru
      _
    // Predicated region
    $region10: #{tpu_custom_call.1} parent=1 // pred_check
      _
    $region11: #{tpu_custom_call.1} parent=1 // pred_check_branch
      %15 = sbr.rel (0) target = $region13
    $region12: #{tpu_custom_call.1} parent=1 // pred_region
      _
    $region13: #{tpu_custom_call.1} parent=1 // pred_fallthru
      _
    // Predicated region
    $region14: #{tpu_custom_call.1} parent=1 // pred_check
      _
    $region15: #{tpu_custom_call.1} parent=1 // pred_check_branch
      %17 = sbr.rel (0) target = $region17
    $region16: #{tpu_custom_call.1} parent=1 // pred_region
      %s19 = ssub.s32 2048, 2048
      %20 = vsyncadd [#allocation7], %s19
      %s21 = sshll.u32 [#allocation6], 4
      %s22 = int_to_ptr.vmem [resolvable:$true] %s21
      %27 = dma.hbm_to_vmem [thread:$0]  %s3, 2048, %s22, [#allocation7], 128, 128, 8
    $region17: #{tpu_custom_call.1} parent=1 // pred_fallthru
      _
    // Predicated region
    $region18: #{tpu_custom_call.1} parent=1 // pred_check
      _
    $region19: #{tpu_custom_call.1} parent=1 // pred_check_branch
      %29 = sbr.rel (0) target = $region21
    $region20: #{tpu_custom_call.1} parent=1 // pred_region
      %30 = dma.done [#allocation7], 2048
    $region21: #{tpu_custom_call.1} parent=1 // pred_fallthru
      _
    %p31 = scmp.eq.s32.totalorder 0, 0
    // Predicated region
    $region22: #{tpu_custom_call.1} parent=1 // pred_check
      %p32 = pneg %p31
    $region23: #{tpu_custom_call.1} parent=1 // pred_check_branch
      %34 = sbr.rel (%p32) target = $region25
    $region24: #{tpu_custom_call.1} parent=1 // pred_region
      %vm35 = vcmask 7168
      %36 = vst.msk [vmem:[#allocation2] sm:$0xff] %vm35, -inf
      %37 = vst.msk [vmem:[#allocation2 + $0x8] sm:$0xff] %vm35, -inf
      %38 = vst.msk [vmem:[#allocation3] sm:$0xff] %vm35, 0.0
      %39 = vst.msk [vmem:[#allocation3 + $0x8] sm:$0xff] %vm35, 0.0
      %40 = vst.msk [vmem:[#allocation4] sm:$0xff] %vm35, 0.0
      %41 = vst.msk [vmem:[#allocation4 + $0x8] sm:$0xff] %vm35, 0.0
      %42 = vst.msk [vmem:[#allocation5] sm:$0xff] %vm35, 0.0
      %43 = vst.msk [vmem:[#allocation5 + $0x8] sm:$0xff] %vm35, 0.0
    $region25: #{tpu_custom_call.1} parent=1 // pred_fallthru
      _
    %v44 = vld [vmem:[%s2] sm:$0xff]
    %v45 = vld [vmem:[%s2 + $0x8] sm:$0xff]
    %v46 = vld [vmem:[#allocation6] sm:$0xff]
    %v47 = vld [vmem:[#allocation6 + $0x8] sm:$0xff]
    %v48 = vld [vmem:[#allocation6 + $0x10] sm:$0xff]
    %v49 = vld [vmem:[#allocation6 + $0x18] sm:$0xff]
    %v50 = vld [vmem:[#allocation6 + $0x20] sm:$0xff]
    %v51 = vld [vmem:[#allocation6 + $0x28] sm:$0xff]
    %v52 = vld [vmem:[#allocation6 + $0x30] sm:$0xff]
    %v53 = vld [vmem:[#allocation6 + $0x38] sm:$0xff]
    %v54 = vld [vmem:[#allocation6 + $0x40] sm:$0xff]
    %v55 = vld [vmem:[#allocation6 + $0x48] sm:$0xff]
    %v56 = vld [vmem:[#allocation6 + $0x50] sm:$0xff]
    %v57 = vld [vmem:[#allocation6 + $0x58] sm:$0xff]
    %v58 = vld [vmem:[#allocation6 + $0x60] sm:$0xff]
    %v59 = vld [vmem:[#allocation6 + $0x68] sm:$0xff]
    %v60 = vld [vmem:[#allocation6 + $0x70] sm:$0xff]
    %v61 = vld [vmem:[#allocation6 + $0x78] sm:$0xff]
    %62 = vmatprep.subr.mxu0 0.0
    %63 = vmatpush1.xpose.msra.mxu0 %v46
    %64 = vmatprep.subr.mxu0 0.0
    %65 = vmatpush1.xpose.msra.mxu0 %v47
    %66 = vmatprep.subr.mxu0 0.0
    %67 = vmatpush1.xpose.msra.mxu0 %v48
    %68 = vmatprep.subr.mxu0 0.0
    %69 = vmatpush1.xpose.msra.mxu0 %v49
    %70 = vmatprep.subr.mxu0 0.0
    %71 = vmatpush1.xpose.msra.mxu0 %v50
    %72 = vmatprep.subr.mxu0 0.0
    %73 = vmatpush1.xpose.msra.mxu0 %v51
    %74 = vmatprep.subr.mxu0 0.0
    %75 = vmatpush1.xpose.msra.mxu0 %v52
    %76 = vmatprep.subr.mxu0 0.0
    %77 = vmatpush1.xpose.msra.mxu0 %v53
    %78 = vmatprep.subr.mxu0 0.0
    %79 = vmatpush1.xpose.msra.mxu0 %v54
    %80 = vmatprep.subr.mxu0 0.0
    %81 = vmatpush1.xpose.msra.mxu0 %v55
    %82 = vmatprep.subr.mxu0 0.0
    %83 = vmatpush1.xpose.msra.mxu0 %v56
    %84 = vmatprep.subr.mxu0 0.0
    %85 = vmatpush1.xpose.msra.mxu0 %v57
    %86 = vmatprep.subr.mxu0 0.0
    %87 = vmatpush1.xpose.msra.mxu0 %v58
    %88 = vmatprep.subr.mxu0 0.0
    %89 = vmatpush1.xpose.msra.mxu0 %v59
    %90 = vmatprep.subr.mxu0 0.0
    %91 = vmatpush1.xpose.msra.mxu0 %v60
    %92 = vmatprep.subr.mxu0 0.0
    %93 = vmatpush1.xpose.msra.mxu0 %v61
    %94 = vmatprep.subr.mxu0 0.0
    %95 = vmatpush1.xpose.msra.mxu0 0.0
    %96 = vmatprep.subr.mxu0 0.0
    %97 = vmatpush1.xpose.msra.mxu0 0.0
    %98 = vmatprep.subr.mxu0 0.0
    %99 = vmatpush1.xpose.msra.mxu0 0.0
    %100 = vmatprep.subr.mxu0 0.0
    %101 = vmatpush1.xpose.msra.mxu0 0.0
    %102 = vmatprep.subr.mxu0 0.0
    %103 = vmatpush1.xpose.msra.mxu0 0.0
    %104 = vmatprep.subr.mxu0 0.0
    %105 = vmatpush1.xpose.msra.mxu0 0.0
    %106 = vmatprep.subr.mxu0 0.0
    %107 = vmatpush1.xpose.msra.mxu0 0.0
    %108 = vmatprep.subr.mxu0 0.0
    %109 = vmatpush1.xpose.msra.mxu0 0.0
    %110 = vmatprep.subr.mxu0 0.0
    %111 = vmatpush1.xpose.msra.mxu0 0.0
    %112 = vmatprep.subr.mxu0 0.0
    %113 = vmatpush1.xpose.msra.mxu0 0.0
    %114 = vmatprep.subr.mxu0 0.0
    %115 = vmatpush1.xpose.msra.mxu0 0.0
    %116 = vmatprep.subr.mxu0 0.0
    %117 = vmatpush1.xpose.msra.mxu0 0.0
    %118 = vmatprep.subr.mxu0 0.0
    %119 = vmatpush1.xpose.msra.mxu0 0.0
    %120 = vmatprep.subr.mxu0 0.0
    %121 = vmatpush1.xpose.msra.mxu0 0.0
    %122 = vmatprep.subr.mxu0 0.0
    %123 = vmatpush1.xpose.msra.mxu0 0.0
    %124 = vmatprep.subr.mxu0 0.0
    %125 = vmatpush1.xpose.msra.mxu0 0.0
    %126 = vmatprep.mubr.f32.mxu0 0.0
    %127 = vmatmul.mubr.f32.gmra.mrb[0].mxu0 %v44
    %v128 = vpop.f32.mrb[0].mxu0
    %v129 = vadd.f32 0.0, %v128
    %v130 = vpop.f32.mrb[0].mxu0
    %131 = vmatprep.mubr.f32.mxu0 0.0
    %132 = vmatmul.mubr.f32.gmra.mrb[0].mxu0 %v45
    %v133 = vpop.f32.mrb[0].mxu0
    %v134 = vadd.f32 0.0, %v133
    %v135 = vpop.f32.mrb[0].mxu0
    %136 = vdwg.mxu0
    %s137 = smul.u32 0, 16
    %v138 = vlaneseq
    %v139 = vshrl.u32 %v138, 7
    %v140 = vadd.s32 %v139, 8
    %v141 = vstv %s137
    %v142 = vadd.s32 %v141, %v139
    %v143 = vadd.s32 %v141, %v140
    %s144 = smul.u32 0, 128
    %v145 = vlaneseq
    %v146 = vand.u32 %v145, 127
    %v147 = vstv %s144
    %v148 = vadd.s32 %v147, %v146
    %vm149 = vcmp.ne.s32.totalorder %v142, %v148
    %vm150 = vcmp.ne.s32.totalorder %v143, %v148
    %vm151 = vcmp.lt.s32.totalorder %v148, 16
    %vm152 = vmand %vm149, %vm151
    %vm153 = vmand %vm150, %vm151
    %v154 = vld [vmem:[#allocation2] sm:$0xff]
    %v155 = vld [vmem:[#allocation2 + $0x8] sm:$0xff]
    %156 = vmax.xlane.f32.xlu0 %v129
    %v157 = vpop.xlane.xlu0 %156
    %158 = vmax.xlane.f32.xlu0 %v134
    %v159 = vpop.xlane.xlu0 %158
    %v160 = vmax.f32 %v154, %v157
    %v161 = vmax.f32 %v155, %v159
    %v162 = vsub.f32 %v154, %v160
    %v163 = vsub.f32 %v155, %v161
    %v164 = vmul.f32 %v162, 1.442695
    %v165 = vpow.pop %v164
    %v166 = vmul.f32 %v163, 1.442695
    %v167 = vpow.pop %v166
    %169 = vset.pattern.permute.xlu0 0
    %170 = vperm.xlu0 %169, %v160
    %v171 = vpop.permute.xlu0 %170
    %174 = vset.pattern.permute.xlu0 0
    %175 = vperm.xlu0 %174, %v161
    %v176 = vpop.permute.xlu0 %175
    %v178 = vsub.f32 %v129, %v171
    %v179 = vsub.f32 %v134, %v176
    %v180 = vmul.f32 %v178, 1.442695
    %v181 = vpow.pop %v180
    %v182 = vmul.f32 %v179, 1.442695
    %v183 = vpow.pop %v182
    %v184 = vsel %vm152, %v181, 0.0
    %v185 = vsel %vm153, %v183, 0.0
    %v186 = vld [vmem:[%s0] sm:$0xff]
    %v187 = vld [vmem:[%s0 + $0x8] sm:$0xff]
    %v188 = vld [vmem:[%s1] sm:$0x1]
    %189 = vset.pattern.permute.xlu0 0
    %190 = vperm.xlu0 %189, %v186
    %v191 = vpop.permute.xlu0 %190
    %192 = vset.pattern.permute.xlu0 0
    %193 = vperm.xlu0 %192, %v187
    %v194 = vpop.permute.xlu0 %193
    %v195 = vlaneseq
    %v196 = vshrl.u32 %v195, 7
    %v197 = vsub.s32 0, %v196
    %v198 = vrot.slane %v188, %v197
    %vm199 = vcmp.eq.s32.totalorder %v191, %v198
    %vm200 = vcmp.eq.s32.totalorder %v194, %v198
    %vm201 = vmand %vm199, %vm152
    %vm202 = vmand %vm200, %vm153
    %v203 = vsel %vm201, 1.0, 0.0
    %v204 = vsel %vm202, 1.0, 0.0
    %vm205 = vcmask 7168
    %206 = vst.msk [vmem:[#allocation2] sm:$0xff] %vm205, %v160
    %207 = vst.msk [vmem:[#allocation2 + $0x8] sm:$0xff] %vm205, %v161
    %v208 = vld [vmem:[#allocation3] sm:$0xff]
    %v209 = vld [vmem:[#allocation3 + $0x8] sm:$0xff]
    %v210 = vmul.f32 %v208, %v165
    %v211 = vmul.f32 %v209, %v167
    %212 = vadd.xlane.f32.xlu0 %v184
    %v213 = vpop.xlane.xlu0 %212
    %214 = vadd.xlane.f32.xlu0 %v185
    %v215 = vpop.xlane.xlu0 %214
    %v216 = vadd.f32 %v210, %v213
    %v217 = vadd.f32 %v211, %v215
    %218 = vst.msk [vmem:[#allocation3] sm:$0xff] %vm205, %v216
    %219 = vst.msk [vmem:[#allocation3 + $0x8] sm:$0xff] %vm205, %v217
    %v220 = vld [vmem:[#allocation4] sm:$0xff]
    %v221 = vld [vmem:[#allocation4 + $0x8] sm:$0xff]
    %v222 = vmul.f32 %v203, %v129
    %v223 = vmul.f32 %v204, %v134
    %224 = vadd.xlane.f32.xlu0 %v222
    %v225 = vpop.xlane.xlu0 %224
    %226 = vadd.xlane.f32.xlu0 %v223
    %v227 = vpop.xlane.xlu0 %226
    %v228 = vadd.f32 %v220, %v225
    %v229 = vadd.f32 %v221, %v227
    %230 = vst.msk [vmem:[#allocation4] sm:$0xff] %vm205, %v228
    %231 = vst.msk [vmem:[#allocation4 + $0x8] sm:$0xff] %vm205, %v229
    %v232 = vld [vmem:[#allocation5] sm:$0xff]
    %v233 = vld [vmem:[#allocation5 + $0x8] sm:$0xff]
    %234 = vadd.xlane.f32.xlu0 %v203
    %v235 = vpop.xlane.xlu0 %234
    %236 = vadd.xlane.f32.xlu0 %v204
    %v237 = vpop.xlane.xlu0 %236
    %v238 = vadd.f32 %v232, %v235
    %v239 = vadd.f32 %v233, %v237
    %240 = vst.msk [vmem:[#allocation5] sm:$0xff] %vm205, %v238
    %241 = vst.msk [vmem:[#allocation5 + $0x8] sm:$0xff] %vm205, %v239
    // Predicated region
    $region26: #{tpu_custom_call.1} parent=1 // pred_check
      %p242 = pneg %p31
    $region27: #{tpu_custom_call.1} parent=1 // pred_check_branch
      %244 = sbr.rel (%p242) target = $region29
    $region28: #{tpu_custom_call.1} parent=1 // pred_region
      %v245 = vld [vmem:[#allocation4] sm:$0xff]
      %v246 = vld [vmem:[#allocation4 + $0x8] sm:$0xff]
      %v247 = vld [vmem:[#allocation5] sm:$0xff]
      %v248 = vld [vmem:[#allocation5 + $0x8] sm:$0xff]
      %v249 = vrcp.pop %v247
      %v250 = vmul.f32 %v245, %v249
      %v251 = vrcp.pop %v248
      %v252 = vmul.f32 %v246, %v251
      %v253 = vld [vmem:[#allocation2] sm:$0xff]
      %v254 = vld [vmem:[#allocation2 + $0x8] sm:$0xff]
      %v255 = vsub.f32 %v250, %v253
      %v256 = vsub.f32 %v252, %v254
      %v257 = vld [vmem:[#allocation3] sm:$0xff]
      %v258 = vld [vmem:[#allocation3 + $0x8] sm:$0xff]
      %v259 = vlog2.pop %v257
      %v260 = vmul.f32 %v259, 0.6931472
      %v261 = vlog2.pop %v258
      %v262 = vmul.f32 %v261, 0.6931472
      %v263 = vsub.f32 %v255, %v260
      %v264 = vsub.f32 %v256, %v262
      %v265 = vmul.f32 %v263, -1.0
      %v266 = vmul.f32 %v264, -1.0
      %267 = vst.msk [vmem:[%s4] sm:$0xff] %vm205, %v265
      %268 = vst.msk [vmem:[%s4 + $0x8] sm:$0xff] %vm205, %v266
    $region29: #{tpu_custom_call.1} parent=1 // pred_fallthru
      _
    // Predicated region
    $region30: #{tpu_custom_call.1} parent=1 // pred_check
      _
    $region31: #{tpu_custom_call.1} parent=1 // pred_check_branch
      %270 = sbr.rel (0) target = $region33
    $region32: #{tpu_custom_call.1} parent=1 // pred_region
      _
    $region33: #{tpu_custom_call.1} parent=1 // pred_fallthru
      _
    // Predicated region
    $region34: #{tpu_custom_call.1} parent=1 // pred_check
      _
    $region35: #{tpu_custom_call.1} parent=1 // pred_check_branch
      %272 = sbr.rel (0) target = $region37
    $region36: #{tpu_custom_call.1} parent=1 // pred_region
      _
    $region37: #{tpu_custom_call.1} parent=1 // pred_fallthru
      _
    %273 = vsyncpa [#allocation7], 1

</llo_original>
